<compile_context>
chip_gen: v7x
topology: tpu7x:2x2x1
jax: 0.10.0
libtpu: 0.0.40
codegen_flags: <defaults>
</compile_context>

<pallas_src>
import jax
import jax.numpy as jnp
from jax.experimental import pallas as pl
from jax.experimental.pallas import tpu as pltpu


def _round_up(x, m):
    return ((x + m - 1) // m) * m


def _highway_fused_kernel(x_ref, wn_ref, wg_ref, bn_ref, bg_ref, o_ref):
    """All highway layers applied to one (tm, Dp) row tile.

    Grid = (row_tiles, num_layers). The output block index is constant along
    the layer axis, so o_ref stays resident in VMEM and acts as the running
    activation; it is only written back to HBM when the row tile changes.

    x_ref : (tm, Dp)  input rows (read only on layer 0)
    wn_ref: (Dp, Dp)  transposed nonlinear weight of the current layer
    wg_ref: (Dp, Dp)  transposed gate weight of the current layer
    bn_ref: (1, Dp)   nonlinear bias
    bg_ref: (1, Dp)   gate bias
    o_ref : (tm, Dp)  resident activation / final output rows
    """
    @pl.when(pl.program_id(1) == 0)
    def _():
        o_ref[...] = x_ref[...]

    x = o_ref[...]                     # native dtype, fed straight to the MXU
    x_f32 = x.astype(jnp.float32)

    # Two lane-aligned (tm, Dp) matmuls instead of one (tm, 2*Dp) + mid split.
    nonlinear = jnp.dot(x, wn_ref[...], preferred_element_type=jnp.float32)
    nonlinear = jnp.maximum(nonlinear + bn_ref[...].astype(jnp.float32), 0.0)

    gate = jax.nn.sigmoid(
        jnp.dot(x, wg_ref[...], preferred_element_type=jnp.float32)
        + bg_ref[...].astype(jnp.float32)
    )

    # gate * x + (1 - gate) * nonlinear  ==  nonlinear + gate * (x - nonlinear)
    out = nonlinear + gate * (x_f32 - nonlinear)
    o_ref[...] = out.astype(o_ref.dtype)


def pack_highway_params(weights, biases):
    """One-time param prep (outside the hot path).

    weights: list of (2D, D) arrays (torch.nn.Linear weight layout)
    biases : list of (2D,)  arrays (bias[D:] is the gate bias)

    Returns (wn, wg, bn, bg) stacked as (L, Dp, Dp) / (L, 1, Dp) with
    Dp = round_up(D, 128), pre-transposed so the kernel computes x @ W directly.
    Zero padding is inert: padded activation lanes stay exactly 0 through every
    highway layer.
    """
    D = weights[0].shape[1]
    Dp = _round_up(D, 128)
    wn_l, wg_l, bn_l, bg_l = [], [], [], []
    for w, b in zip(weights, biases):
        wn_l.append(jnp.pad(w[:D, :].T, ((0, Dp - D), (0, Dp - D))))
        wg_l.append(jnp.pad(w[D:, :].T, ((0, Dp - D), (0, Dp - D))))
        bn_l.append(jnp.pad(b[:D], (0, Dp - D)))
        bg_l.append(jnp.pad(b[D:], (0, Dp - D)))
    wn = jnp.stack(wn_l)                    # (L, Dp, Dp)
    wg = jnp.stack(wg_l)                    # (L, Dp, Dp)
    bn = jnp.stack(bn_l)[:, None, :]        # (L, 1, Dp)
    bg = jnp.stack(bg_l)[:, None, :]        # (L, 1, Dp)
    return wn, wg, bn, bg


def highway_forward(inputs, packed_params, *, tm=256):
    """Highway forward pass.

    inputs       : (batch, ..., input_dim)
    packed_params: output of pack_highway_params
    tm           : row-tile size (rows per grid step); capped to the row count.
    """
    wn, wg, bn, bg = packed_params
    L, Dp, _ = wn.shape

    orig_shape = inputs.shape
    D = orig_shape[-1]
    x = inputs.reshape(-1, D)
    M = x.shape[0]

    # Row tile: multiple of 8 sublanes, no larger than the (rounded) row count.
    tm_eff = min(tm, _round_up(M, 8))
    Mp = _round_up(M, tm_eff)
    x_p = jnp.pad(x, ((0, Mp - M), (0, Dp - D)))

    grid = (Mp // tm_eff, L)

    itemsize = x.dtype.itemsize
    w_itemsize = wn.dtype.itemsize
    cost = pl.CostEstimate(
        flops=4 * Mp * Dp * Dp * L,                       # 2 matmuls * 2*M*Dp*Dp
        transcendentals=Mp * Dp * L,                      # sigmoid
        bytes_accessed=(2 * Mp * Dp * itemsize
                        + L * (2 * Dp * Dp + 2 * Dp) * w_itemsize),
    )

    out = pl.pallas_call(
        _highway_fused_kernel,
        out_shape=jax.ShapeDtypeStruct((Mp, Dp), x.dtype),
        grid_spec=pltpu.PrefetchScalarGridSpec(
            num_scalar_prefetch=0,
            grid=grid,
            in_specs=[
                pl.BlockSpec((tm_eff, Dp), lambda i, l: (i, 0)),       # x rows
                pl.BlockSpec((None, Dp, Dp), lambda i, l: (l, 0, 0)),  # W_nonlin
                pl.BlockSpec((None, Dp, Dp), lambda i, l: (l, 0, 0)),  # W_gate
                pl.BlockSpec((None, 1, Dp), lambda i, l: (l, 0, 0)),   # b_nonlin
                pl.BlockSpec((None, 1, Dp), lambda i, l: (l, 0, 0)),   # b_gate
            ],
            out_specs=pl.BlockSpec((tm_eff, Dp), lambda i, l: (i, 0)),
        ),
        compiler_params=pltpu.CompilerParams(
            dimension_semantics=("parallel", "arbitrary"),
        ),
        cost_estimate=cost,
    )(x_p, wn, wg, bn, bg)

    return out[:M, :D].reshape(orig_shape)


def init_highway_params(key, input_dim, num_layers):
    """Synthetic params mimicking torch.nn.Linear init shapes.

    Weight: (2*input_dim, input_dim); bias: (2*input_dim,), with the gate half
    (bias[input_dim:]) filled with 1.0 as in the PyTorch module __init__.
    """
    weights, biases = [], []
    bound = 1.0 / jnp.sqrt(jnp.float32(input_dim))
    for _ in range(num_layers):
        kw, kb, key = jax.random.split(key, 3)
        w = jax.random.uniform(
            kw, (2 * input_dim, input_dim), jnp.float32, -bound, bound
        )
        b = jax.random.uniform(kb, (2 * input_dim,), jnp.float32, -bound, bound)
        b = b.at[input_dim:].set(1.0)
        weights.append(w)
        biases.append(b)
    return weights, biases


def _reference_highway(inputs, weights, biases):
    """Pure-JAX reference matching the PyTorch forward."""
    x = inputs
    for w, b in zip(weights, biases):
        proj = x @ w.T + b
        d = x.shape[-1]
        nonlinear, gate_logits = proj[..., :d], proj[..., d:]
        nonlinear = jax.nn.relu(nonlinear)
        gate = jax.nn.sigmoid(gate_logits)
        x = gate * x + (1.0 - gate) * nonlinear
    return x


if __name__ == "__main__":
    key = jax.random.PRNGKey(0)

    # Small ELMo-like shapes.
    batch, seq, input_dim, num_layers = 2, 8, 32, 2
    k_in, k_par, key = jax.random.split(key, 3)
    inputs = jax.random.normal(k_in, (batch, seq, input_dim), jnp.float32)
    weights, biases = init_highway_params(k_par, input_dim, num_layers)
    packed = pack_highway_params(weights, biases)

    out = highway_forward(inputs, packed, tm=256)
    out = jax.block_until_ready(out)
    ref = _reference_highway(inputs, weights, biases)
    assert out.shape == inputs.shape
    assert jnp.allclose(out, ref, atol=2e-5, rtol=2e-5), "mismatch (small case)"

    # Second case exercising multiple row tiles and M/D padding.
    batch2, seq2, input_dim2, num_layers2 = 4, 96, 160, 3
    k_in2, k_par2, key = jax.random.split(key, 3)
    inputs2 = jax.random.normal(k_in2, (batch2, seq2, input_dim2), jnp.float32)
    weights2, biases2 = init_highway_params(k_par2, input_dim2, num_layers2)
    packed2 = pack_highway_params(weights2, biases2)

    out2 = highway_forward(inputs2, packed2, tm=256)
    out2 = jax.block_until_ready(out2)
    ref2 = _reference_highway(inputs2, weights2, biases2)
    assert out2.shape == inputs2.shape
    assert jnp.allclose(out2, ref2, atol=1e-4, rtol=1e-4), "mismatch (tiled case)"

    print("KERNEL_OK")
</pallas_src>

<mosaic_0001>
module attributes {stable_mosaic.version = 11 : i64} {
  func.func @_highway_fused_kernel(%arg0: i32, %arg1: i32, %arg2: memref<16x128xf32, #tpu.memory_space<vmem>>, %arg3: memref<1x128x128xf32, #tpu.memory_space<vmem>>, %arg4: memref<1x128x128xf32, #tpu.memory_space<vmem>>, %arg5: memref<1x1x128xf32, #tpu.memory_space<vmem>>, %arg6: memref<1x1x128xf32, #tpu.memory_space<vmem>>, %arg7: memref<16x128xf32, #tpu.memory_space<vmem>>) attributes {dimension_semantics = [#tpu.dimension_semantics<parallel>, #tpu.dimension_semantics<arbitrary>], iteration_bounds = array<i64: 1, 2>, scalar_prefetch = 0 : i64, scratch_operands = 0 : i64, tpu.core_type = #tpu.core_type<tc>, window_params = [{transform_indices = @transform_0, window_bounds = array<i64: 16, 128>}, {transform_indices = @transform_1, window_bounds = array<i64: 1, 128, 128>}, {transform_indices = @transform_2, window_bounds = array<i64: 1, 128, 128>}, {transform_indices = @transform_3, window_bounds = array<i64: 1, 1, 128>}, {transform_indices = @transform_4, window_bounds = array<i64: 1, 1, 128>}, {transform_indices = @transform_5, window_bounds = array<i64: 16, 128>}]} {
    %c0_i32 = arith.constant 0 : i32
    %0 = arith.cmpi eq, %arg1, %c0_i32 : i32
    %1 = arith.extui %0 : i1 to i32
    %c0_i32_0 = arith.constant 0 : i32
    %2 = arith.cmpi ne, %1, %c0_i32_0 : i32
    scf.if %2 {
      %c0_19 = arith.constant 0 : index
      %c0_20 = arith.constant 0 : index
      %29 = vector.load %arg2[%c0_19, %c0_20] : memref<16x128xf32, #tpu.memory_space<vmem>>, vector<16x128xf32>
      %c0_21 = arith.constant 0 : index
      %c0_22 = arith.constant 0 : index
      %30 = vector.load %arg7[%c0_21, %c0_22] : memref<16x128xf32, #tpu.memory_space<vmem>>, vector<16x128xf32>
      tpu.vector_store %arg7[%c0_21, %c0_22], %29 {strides = array<i32>} : memref<16x128xf32, #tpu.memory_space<vmem>>, vector<16x128xf32>,
    } else {
    }
    %c0 = arith.constant 0 : index
    %c0_1 = arith.constant 0 : index
    %3 = vector.load %arg7[%c0, %c0_1] : memref<16x128xf32, #tpu.memory_space<vmem>>, vector<16x128xf32>
    %c0_2 = arith.constant 0 : index
    %c0_3 = arith.constant 0 : index
    %c0_4 = arith.constant 0 : index
    %4 = vector.load %arg3[%c0_2, %c0_3, %c0_4] : memref<1x128x128xf32, #tpu.memory_space<vmem>>, vector<1x128x128xf32>
    %5 = vector.shape_cast %4 : vector<1x128x128xf32> to vector<128x128xf32>
    %cst = arith.constant dense<0.000000e+00> : vector<16x128xf32>
    %6 = tpu.matmul %3, %5, %cst {dimension_numbers = #tpu.dot_dimension_numbers<[1], [0], [0], [1], [0, 0, 1, 1], [], []>} : vector<16x128xf32>, vector<128x128xf32>, vector<16x128xf32> -> vector<16x128xf32>
    %c0_5 = arith.constant 0 : index
    %c0_6 = arith.constant 0 : index
    %c0_7 = arith.constant 0 : index
    %7 = vector.load %arg5[%c0_5, %c0_6, %c0_7] : memref<1x1x128xf32, #tpu.memory_space<vmem>>, vector<1x1x128xf32>
    %8 = vector.shape_cast %7 : vector<1x1x128xf32> to vector<1x128xf32>
    %9 = vector.broadcast %8 : vector<1x128xf32> to vector<16x128xf32>
    %10 = arith.addf %6, %9 : vector<16x128xf32>
    %cst_8 = arith.constant 0.000000e+00 : f32
    %11 = vector.broadcast %cst_8 : f32 to vector<16x128xf32>
    %12 = arith.maximumf %10, %11 : vector<16x128xf32>
    %c0_9 = arith.constant 0 : index
    %c0_10 = arith.constant 0 : index
    %c0_11 = arith.constant 0 : index
    %13 = vector.load %arg4[%c0_9, %c0_10, %c0_11] : memref<1x128x128xf32, #tpu.memory_space<vmem>>, vector<1x128x128xf32>
    %14 = vector.shape_cast %13 : vector<1x128x128xf32> to vector<128x128xf32>
    %cst_12 = arith.constant dense<0.000000e+00> : vector<16x128xf32>
    %15 = tpu.matmul %3, %14, %cst_12 {dimension_numbers = #tpu.dot_dimension_numbers<[1], [0], [0], [1], [0, 0, 1, 1], [], []>} : vector<16x128xf32>, vector<128x128xf32>, vector<16x128xf32> -> vector<16x128xf32>
    %c0_13 = arith.constant 0 : index
    %c0_14 = arith.constant 0 : index
    %c0_15 = arith.constant 0 : index
    %16 = vector.load %arg6[%c0_13, %c0_14, %c0_15] : memref<1x1x128xf32, #tpu.memory_space<vmem>>, vector<1x1x128xf32>
    %17 = vector.shape_cast %16 : vector<1x1x128xf32> to vector<1x128xf32>
    %18 = vector.broadcast %17 : vector<1x128xf32> to vector<16x128xf32>
    %19 = arith.addf %15, %18 : vector<16x128xf32>
    %20 = arith.negf %19 : vector<16x128xf32>
    %21 = math.exp %20 : vector<16x128xf32>
    %cst_16 = arith.constant 1.000000e+00 : f32
    %22 = vector.broadcast %cst_16 : f32 to vector<16x128xf32>
    %23 = arith.addf %22, %21 : vector<16x128xf32>
    %24 = arith.divf %22, %23 : vector<16x128xf32>
    %25 = arith.subf %3, %12 : vector<16x128xf32>
    %26 = arith.mulf %24, %25 : vector<16x128xf32>
    %27 = arith.addf %12, %26 : vector<16x128xf32>
    %c0_17 = arith.constant 0 : index
    %c0_18 = arith.constant 0 : index
    %28 = vector.load %arg7[%c0_17, %c0_18] : memref<16x128xf32, #tpu.memory_space<vmem>>, vector<16x128xf32>
    tpu.vector_store %arg7[%c0_17, %c0_18], %27 {strides = array<i32>} : memref<16x128xf32, #tpu.memory_space<vmem>>, vector<16x128xf32>,
    return
  }
  func.func @transform_0(%arg0: i32, %arg1: i32) -> (i32, i32) {
    %c0_i32 = arith.constant 0 : i32
    %c0_i32_0 = arith.constant 0 : i32
    return %arg0, %c0_i32 : i32, i32
  }
  func.func @transform_1(%arg0: i32, %arg1: i32) -> (i32, i32, i32) {
    %c0_i32 = arith.constant 0 : i32
    %c0_i32_0 = arith.constant 0 : i32
    %c0_i32_1 = arith.constant 0 : i32
    return %arg1, %c0_i32, %c0_i32_0 : i32, i32, i32
  }
  func.func @transform_2(%arg0: i32, %arg1: i32) -> (i32, i32, i32) {
    %c0_i32 = arith.constant 0 : i32
    %c0_i32_0 = arith.constant 0 : i32
    %c0_i32_1 = arith.constant 0 : i32
    return %arg1, %c0_i32, %c0_i32_0 : i32, i32, i32
  }
  func.func @transform_3(%arg0: i32, %arg1: i32) -> (i32, i32, i32) {
    %c0_i32 = arith.constant 0 : i32
    %c0_i32_0 = arith.constant 0 : i32
    %c0_i32_1 = arith.constant 0 : i32
    return %arg1, %c0_i32, %c0_i32_0 : i32, i32, i32
  }
  func.func @transform_4(%arg0: i32, %arg1: i32) -> (i32, i32, i32) {
    %c0_i32 = arith.constant 0 : i32
    %c0_i32_0 = arith.constant 0 : i32
    %c0_i32_1 = arith.constant 0 : i32
    return %arg1, %c0_i32, %c0_i32_0 : i32, i32, i32
  }
  func.func @transform_5(%arg0: i32, %arg1: i32) -> (i32, i32) {
    %c0_i32 = arith.constant 0 : i32
    %c0_i32_0 = arith.constant 0 : i32
    return %arg0, %c0_i32 : i32, i32
  }
}

</mosaic_0001>

<llo_original>
// kernel: tpu_custom_call.1
$region0: #{tpu_custom_call.1}
  #allocation0 [shape = 'u32[]', space=smem, size = 0x4, offset = 0x4, fixed_abs, tag = 'smem constant byte address 0x4 - core index']
  #allocation1 [shape = 'u32[144,128]{1,0:T(1,128)}', space=vmem, size = 0x12000, scoped, tag = 'internal scratch']
  %s0 = inlined_call_operand.hbm [shape: f32[16,128], index: 0, kind: input, shape index: {}]
  %s1 = inlined_call_operand.hbm [shape: f32[2,128,128], index: 1, kind: input, shape index: {}]
  %s2 = inlined_call_operand.hbm [shape: f32[2,128,128], index: 2, kind: input, shape index: {}]
  %s3 = inlined_call_operand.vmem [shape: f32[2,1,128], index: 3, kind: input, shape index: {}]
  %s4 = inlined_call_operand.vmem [shape: f32[2,1,128], index: 4, kind: input, shape index: {}]
  %s5 = inlined_call_operand.hbm [shape: f32[16,128], index: 5, kind: output, shape index: {}]
  %s6 = sld [smem:[#allocation0]]
  $region69: #{tpu_custom_call.1} parent=0
    _
  %s8 = ssub.s32 1, %s6
  %s9 = scalar_select 0, %s8, %s6
  $region1: #{tpu_custom_call.1} parent=0
    #allocation2 [shape = 'u8[8192]{0}', space=vmem, size = 0x2000, scoped, tag = 'input window, operand 0, single buffered']
    #allocation3 [shape = 's32[2]{0}', space=sflag, size = 0x8, scoped, tag = 'scoped memory for tpu_custom_call.1']
    #allocation4 [shape = 's32[2]{0}', space=sflag, size = 0x8, scoped, tag = 'scoped memory for tpu_custom_call.1']
    #allocation5 [shape = 'u8[131072]{0}', space=vmem, size = 0x20000, scoped, tag = 'input window, operand 1']
    #allocation6 [shape = 's32[2]{0}', space=sflag, size = 0x8, scoped, tag = 'scoped memory for tpu_custom_call.1']
    #allocation7 [shape = 'u8[131072]{0}', space=vmem, size = 0x20000, scoped, tag = 'input window, operand 2']
    #allocation8 [shape = 'u8[8192]{0}', space=vmem, size = 0x2000, scoped, tag = 'output window, operand 0, single buffered']
    %10 = vsyncpa [#allocation3], 0
    %11 = vsyncpa [#allocation6], 0
    %s12 = scalar_lea.sflag [#allocation6], 1
    %13 = vsyncpa %s12, 0
    %14 = vsyncpa [#allocation4], 0
    loop: start=0, step=1, limit=4
    $region2: #{tpu_custom_call.1} parent=1 // loop_pre_header
      _
    $region3: #{tpu_custom_call.1} parent=1 // loop_header
      %s16 = sphi 0, %s20
      %p17 = scmp.ge.s32.totalorder %s16, 4
      %s23 = sphi 0, %s35
      %s24 = sphi 0, %s31
      %s25 = sphi 0, %s23
      %s26 = sphi 0, %s24
      %s27 = sphi 0, %s25
      %s28 = sphi 0, %s26
      %s38 = sphi 0, %s40
      %s41 = sphi 0, %s38
      %s42 = sphi 0, %s41
      %s58 = sphi 0, %s42
      %s64 = sphi 0, %s66
      %s67 = sphi 0, %s64
      %s68 = sphi 0, %s67
      %s84 = sphi 0, %s68
      %s90 = sphi 0, %s92
      %s93 = sphi 0, %s90
      %s94 = sphi 0, %s93
      %s110 = sphi 0, %s94
      %s116 = sphi 0, %s118
      %s119 = sphi 0, %s116
      %s120 = sphi 0, %s119
      %s136 = sphi 0, %s120
      %s142 = sphi 0, %s144
      %s145 = sphi 0, %s142
      %s146 = sphi 0, %s145
      %s162 = sphi 0, %s146
      %s168 = sphi 0, %s170
      %s171 = sphi 0, %s168
      %s172 = sphi 0, %s171
      %s188 = sphi 0, %s172
    $region4: #{tpu_custom_call.1} parent=1 // loop_header_branch
      %19 = sbr.rel (%p17) target = $region8
    $region5: #{tpu_custom_call.1} parent=1 // loop_body
      %s21 = ssub.s32 %s16, 1
      %s22 = ssub.s32 %s16, 2
      %s29 = sadd.s32 1, %s24
      %p30 = scmp.ge.s32.totalorder %s29, 2
      %s31 = scalar_select %p30, 0, %s29
      %s32 = sadd.s32 1, %s23
      %s33 = scalar_select %p30, %s32, %s23
      %p34 = scmp.ge.s32.totalorder %s33, 1
      %s35 = scalar_select %p34, 0, %s33
      %s36 = ssub.s32 %s23, %s35
      %p37 = scmp.eq.s32.totalorder %s36, 0
      %s39 = sadd.s32 %s38, 1
      %s40 = scalar_select %p37, %s38, %s39
      %p43 = pneg %p37
      %p44 = scmp.eq.s32.totalorder %s16, 1
      %p45 = por %p43, %p44
      %p46 = scmp.ne.s32.totalorder %s38, %s41
      %p47 = scmp.eq.s32.totalorder %s16, 0
      %p48 = por %p46, %p47
      %p49 = scmp.ne.s32.totalorder %s38, %s41
      %p50 = scmp.eq.s32.totalorder %s21, 1
      %p51 = por %p49, %p50
      %p52 = scmp.ne.s32.totalorder %s41, %s42
      %p53 = scmp.eq.s32.totalorder %s21, 0
      %p54 = por %p52, %p53
      %p55 = scmp.ne.s32.totalorder %s41, %s42
      %p56 = scmp.eq.s32.totalorder %s22, 1
      %p57 = por %p55, %p56
      %p59 = scmp.ne.s32.totalorder %s42, %s58
      %p60 = scmp.eq.s32.totalorder %s22, 0
      %p61 = por %p59, %p60
      %s62 = ssub.s32 %s24, %s31
      %p63 = scmp.eq.s32.totalorder %s62, 0
      %s65 = sadd.s32 %s64, 1
      %s66 = scalar_select %p63, %s64, %s65
      %p69 = pneg %p63
      %p70 = scmp.eq.s32.totalorder %s16, 1
      %p71 = por %p69, %p70
      %p72 = scmp.ne.s32.totalorder %s64, %s67
      %p73 = scmp.eq.s32.totalorder %s16, 0
      %p74 = por %p72, %p73
      %p75 = scmp.ne.s32.totalorder %s64, %s67
      %p76 = scmp.eq.s32.totalorder %s21, 1
      %p77 = por %p75, %p76
      %p78 = scmp.ne.s32.totalorder %s67, %s68
      %p79 = scmp.eq.s32.totalorder %s21, 0
      %p80 = por %p78, %p79
      %p81 = scmp.ne.s32.totalorder %s67, %s68
      %p82 = scmp.eq.s32.totalorder %s22, 1
      %p83 = por %p81, %p82
      %p85 = scmp.ne.s32.totalorder %s68, %s84
      %p86 = scmp.eq.s32.totalorder %s22, 0
      %p87 = por %p85, %p86
      %s88 = ssub.s32 %s24, %s31
      %p89 = scmp.eq.s32.totalorder %s88, 0
      %s91 = sadd.s32 %s90, 1
      %s92 = scalar_select %p89, %s90, %s91
      %p95 = pneg %p89
      %p96 = scmp.eq.s32.totalorder %s16, 1
      %p97 = por %p95, %p96
      %p98 = scmp.ne.s32.totalorder %s90, %s93
      %p99 = scmp.eq.s32.totalorder %s16, 0
      %p100 = por %p98, %p99
      %p101 = scmp.ne.s32.totalorder %s90, %s93
      %p102 = scmp.eq.s32.totalorder %s21, 1
      %p103 = por %p101, %p102
      %p104 = scmp.ne.s32.totalorder %s93, %s94
      %p105 = scmp.eq.s32.totalorder %s21, 0
      %p106 = por %p104, %p105
      %p107 = scmp.ne.s32.totalorder %s93, %s94
      %p108 = scmp.eq.s32.totalorder %s22, 1
      %p109 = por %p107, %p108
      %p111 = scmp.ne.s32.totalorder %s94, %s110
      %p112 = scmp.eq.s32.totalorder %s22, 0
      %p113 = por %p111, %p112
      %s114 = ssub.s32 %s24, %s31
      %p115 = scmp.eq.s32.totalorder %s114, 0
      %s117 = sadd.s32 %s116, 1
      %s118 = scalar_select %p115, %s116, %s117
      %p121 = pneg %p115
      %p122 = scmp.eq.s32.totalorder %s16, 1
      %p123 = por %p121, %p122
      %p124 = scmp.ne.s32.totalorder %s116, %s119
      %p125 = scmp.eq.s32.totalorder %s16, 0
      %p126 = por %p124, %p125
      %p127 = scmp.ne.s32.totalorder %s116, %s119
      %p128 = scmp.eq.s32.totalorder %s21, 1
      %p129 = por %p127, %p128
      %p130 = scmp.ne.s32.totalorder %s119, %s120
      %p131 = scmp.eq.s32.totalorder %s21, 0
      %p132 = por %p130, %p131
      %p133 = scmp.ne.s32.totalorder %s119, %s120
      %p134 = scmp.eq.s32.totalorder %s22, 1
      %p135 = por %p133, %p134
      %p137 = scmp.ne.s32.totalorder %s120, %s136
      %p138 = scmp.eq.s32.totalorder %s22, 0
      %p139 = por %p137, %p138
      %s140 = ssub.s32 %s24, %s31
      %p141 = scmp.eq.s32.totalorder %s140, 0
      %s143 = sadd.s32 %s142, 1
      %s144 = scalar_select %p141, %s142, %s143
      %p147 = pneg %p141
      %p148 = scmp.eq.s32.totalorder %s16, 1
      %p149 = por %p147, %p148
      %p150 = scmp.ne.s32.totalorder %s142, %s145
      %p151 = scmp.eq.s32.totalorder %s16, 0
      %p152 = por %p150, %p151
      %p153 = scmp.ne.s32.totalorder %s142, %s145
      %p154 = scmp.eq.s32.totalorder %s21, 1
      %p155 = por %p153, %p154
      %p156 = scmp.ne.s32.totalorder %s145, %s146
      %p157 = scmp.eq.s32.totalorder %s21, 0
      %p158 = por %p156, %p157
      %p159 = scmp.ne.s32.totalorder %s145, %s146
      %p160 = scmp.eq.s32.totalorder %s22, 1
      %p161 = por %p159, %p160
      %p163 = scmp.ne.s32.totalorder %s146, %s162
      %p164 = scmp.eq.s32.totalorder %s22, 0
      %p165 = por %p163, %p164
      %s166 = ssub.s32 %s23, %s35
      %p167 = scmp.eq.s32.totalorder %s166, 0
      %s169 = sadd.s32 %s168, 1
      %s170 = scalar_select %p167, %s168, %s169
      %p173 = pneg %p167
      %p174 = scmp.eq.s32.totalorder %s16, 1
      %p175 = por %p173, %p174
      %p176 = scmp.ne.s32.totalorder %s168, %s171
      %p177 = scmp.eq.s32.totalorder %s16, 0
      %p178 = por %p176, %p177
      %p179 = scmp.ne.s32.totalorder %s168, %s171
      %p180 = scmp.eq.s32.totalorder %s21, 1
      %p181 = por %p179, %p180
      %p182 = scmp.ne.s32.totalorder %s171, %s172
      %p183 = scmp.eq.s32.totalorder %s21, 0
      %p184 = por %p182, %p183
      %p185 = scmp.ne.s32.totalorder %s171, %s172
      %p186 = scmp.eq.s32.totalorder %s22, 1
      %p187 = por %p185, %p186
      %p189 = scmp.ne.s32.totalorder %s172, %s188
      %p190 = scmp.eq.s32.totalorder %s22, 0
      %p191 = por %p189, %p190
      %p192 = scmp.le.s32.totalorder 1, %s16
      %p193 = scmp.lt.s32.totalorder %s16, 3
      %p194 = pnand %p192, %p193
      %p195 = pneg %p194
      // Predicated region
      $region9: #{tpu_custom_call.1} parent=5 // pred_check
        _
      $region10: #{tpu_custom_call.1} parent=5 // pred_check_branch
        %197 = sbr.rel (%p194) target = $region12
      $region11: #{tpu_custom_call.1} parent=5 // pred_region
        %s198 = ssub.s32 %s16, 1
        // Predicated region
        $region13: #{tpu_custom_call.1} parent=11 // pred_check
          %p199 = pneg %p54
        $region14: #{tpu_custom_call.1} parent=11 // pred_check_branch
          %201 = sbr.rel (%p199) target = $region16
        $region15: #{tpu_custom_call.1} parent=11 // pred_region
          %s202 = smul.u32 2, %s25
          %s204 = ssub.s32 256, 256
          %205 = vsyncadd [#allocation3], %s204
          %s206 = smul.addr %s202, 128
          %s207 = scalar_lea.hbm %s0, %s206
          %s208 = sshll.u32 [#allocation2], 4
          %s209 = int_to_ptr.vmem [resolvable:$true] %s208
          %214 = dma.hbm_to_vmem [thread:$0]  %s207, 256, %s209, [#allocation3], 128, 128, 8
        $region16: #{tpu_custom_call.1} parent=11 // pred_fallthru
          _
      $region12: #{tpu_custom_call.1} parent=5 // pred_fallthru
        _
      %p215 = scmp.lt.s32.totalorder %s16, 2
      // Predicated region
      $region17: #{tpu_custom_call.1} parent=5 // pred_check
        %p216 = pneg %p215
      $region18: #{tpu_custom_call.1} parent=5 // pred_check_branch
        %218 = sbr.rel (%p216) target = $region20
      $region19: #{tpu_custom_call.1} parent=5 // pred_region
        // Predicated region
        $region21: #{tpu_custom_call.1} parent=19 // pred_check
          %p219 = pneg %p74
        $region22: #{tpu_custom_call.1} parent=19 // pred_check_branch
          %221 = sbr.rel (%p219) target = $region24
        $region23: #{tpu_custom_call.1} parent=19 // pred_region
          %s222 = sand.u32 %s16, 1
          %s223 = scalar_lea.sflag [#allocation6], %s222
          %s224 = sand.u32 %s64, 1
          %s225 = smul.addr %s224, 128
          %s226 = scalar_lea.vmem [#allocation5], %s225
          %s228 = ssub.s32 2048, 2048
          %229 = vsyncadd %s223, %s228
          %s230 = smul.addr %s24, 16
          %s231 = smul.addr %s230, 128
          %s232 = scalar_lea.hbm %s1, %s231
          %s233 = sshll.u32 %s226, 4
          %s234 = int_to_ptr.vmem [resolvable:$true] %s233
          %239 = dma.hbm_to_vmem [thread:$0]  %s232, 2048, %s234, %s223, 128, 128, 8
        $region24: #{tpu_custom_call.1} parent=19 // pred_fallthru
          _
        // Predicated region
        $region25: #{tpu_custom_call.1} parent=19 // pred_check
          %p240 = pneg %p100
        $region26: #{tpu_custom_call.1} parent=19 // pred_check_branch
          %242 = sbr.rel (%p240) target = $region28
        $region27: #{tpu_custom_call.1} parent=19 // pred_region
          %s243 = sand.u32 %s16, 1
          %s244 = scalar_lea.sflag [#allocation6], %s243
          %s245 = sand.u32 %s90, 1
          %s246 = smul.addr %s245, 128
          %s247 = scalar_lea.vmem [#allocation7], %s246
          %s249 = ssub.s32 2048, 2048
          %250 = vsyncadd %s244, %s249
          %s251 = smul.addr %s24, 16
          %s252 = smul.addr %s251, 128
          %s253 = scalar_lea.hbm %s2, %s252
          %s254 = sshll.u32 %s247, 4
          %s255 = int_to_ptr.vmem [resolvable:$true] %s254
          %260 = dma.hbm_to_vmem [thread:$0]  %s253, 2048, %s255, %s244, 128, 128, 8
        $region28: #{tpu_custom_call.1} parent=19 // pred_fallthru
          _
        // Predicated region
        $region29: #{tpu_custom_call.1} parent=19 // pred_check
          %p261 = pneg %p126
        $region30: #{tpu_custom_call.1} parent=19 // pred_check_branch
          %263 = sbr.rel (%p261) target = $region32
        $region31: #{tpu_custom_call.1} parent=19 // pred_region
          %p264 = scmp.lt.s32.totalorder %s24, 1
          %s265 = scalar_select %p264, %s24, 1
          %s266 = scalar_lea.vmem %s3, %s265
        $region32: #{tpu_custom_call.1} parent=19 // pred_fallthru
          _
        // Predicated region
        $region33: #{tpu_custom_call.1} parent=19 // pred_check
          %p267 = pneg %p152
        $region34: #{tpu_custom_call.1} parent=19 // pred_check_branch
          %269 = sbr.rel (%p267) target = $region36
        $region35: #{tpu_custom_call.1} parent=19 // pred_region
          %p270 = scmp.lt.s32.totalorder %s24, 1
          %s271 = scalar_select %p270, %s24, 1
          %s272 = scalar_lea.vmem %s4, %s271
        $region36: #{tpu_custom_call.1} parent=19 // pred_fallthru
          _
      $region20: #{tpu_custom_call.1} parent=5 // pred_fallthru
        _
      %p273 = scmp.le.s32.totalorder 1, %s16
      %p274 = scmp.lt.s32.totalorder %s16, 3
      %p275 = pnand %p273, %p274
      %p276 = pneg %p275
      // Predicated region
      $region37: #{tpu_custom_call.1} parent=5 // pred_check
        _
      $region38: #{tpu_custom_call.1} parent=5 // pred_check_branch
        %278 = sbr.rel (%p275) target = $region40
      $region39: #{tpu_custom_call.1} parent=5 // pred_region
        %s279 = ssub.s32 %s16, 1
        // Predicated region
        $region41: #{tpu_custom_call.1} parent=39 // pred_check
          %p280 = pneg %p54
        $region42: #{tpu_custom_call.1} parent=39 // pred_check_branch
          %282 = sbr.rel (%p280) target = $region44
        $region43: #{tpu_custom_call.1} parent=39 // pred_region
          %283 = dma.done [#allocation3], 256
        $region44: #{tpu_custom_call.1} parent=39 // pred_fallthru
          _
        %s284 = sand.u32 %s21, 1
        %s285 = scalar_lea.sflag [#allocation6], %s284
        %s286 = sand.u32 %s67, 1
        %s287 = smul.addr %s286, 128
        %s288 = scalar_lea.vmem [#allocation5], %s287
        // Predicated region
        $region45: #{tpu_custom_call.1} parent=39 // pred_check
          %p289 = pneg %p80
        $region46: #{tpu_custom_call.1} parent=39 // pred_check_branch
          %291 = sbr.rel (%p289) target = $region48
        $region47: #{tpu_custom_call.1} parent=39 // pred_region
          %292 = dma.done %s285, 2048
        $region48: #{tpu_custom_call.1} parent=39 // pred_fallthru
          _
        %s293 = sand.u32 %s21, 1
        %s294 = scalar_lea.sflag [#allocation6], %s293
        %s295 = sand.u32 %s93, 1
        %s296 = smul.addr %s295, 128
        %s297 = scalar_lea.vmem [#allocation7], %s296
        // Predicated region
        $region49: #{tpu_custom_call.1} parent=39 // pred_check
          %p298 = pneg %p106
        $region50: #{tpu_custom_call.1} parent=39 // pred_check_branch
          %300 = sbr.rel (%p298) target = $region52
        $region51: #{tpu_custom_call.1} parent=39 // pred_region
          %301 = dma.done %s294, 2048
        $region52: #{tpu_custom_call.1} parent=39 // pred_fallthru
          _
        %p302 = pneg %p54
        %p303 = pneg %p51
        %s304 = sand.u32 %s21, 1
        %s305 = scalar_lea.sflag [#allocation6], %s304
        %s306 = sand.u32 %s67, 1
        %s307 = smul.addr %s306, 128
        %s308 = scalar_lea.vmem [#allocation5], %s307
        %p309 = pneg %p80
        %p310 = pneg %p77
        %s311 = sand.u32 %s21, 1
        %s312 = scalar_lea.sflag [#allocation6], %s311
        %s313 = sand.u32 %s93, 1
        %s314 = smul.addr %s313, 128
        %s315 = scalar_lea.vmem [#allocation7], %s314
        %p316 = pneg %p106
        %p317 = pneg %p103
        %p318 = scmp.lt.s32.totalorder %s26, 1
        %s319 = scalar_select %p318, %s26, 1
        %s320 = scalar_lea.vmem %s3, %s319
        %p321 = pneg %p132
        %p322 = pneg %p129
        %p323 = scmp.lt.s32.totalorder %s26, 1
        %s324 = scalar_select %p323, %s26, 1
        %s325 = scalar_lea.vmem %s4, %s324
        %p326 = pneg %p158
        %p327 = pneg %p155
        %p328 = pneg %p184
        %p329 = pneg %p181
        %s330 = smul.u32 2, %s25
        %p331 = scmp.lt.s32.totalorder %s26, 1
        %s332 = scalar_select %p331, %s26, 1
        %s333 = scalar_lea.vmem %s3, %s332
        %p334 = scmp.lt.s32.totalorder %s26, 1
        %s335 = scalar_select %p334, %s26, 1
        %s336 = scalar_lea.vmem %s4, %s335
        %s337 = smul.u32 2, %s25
        %p338 = scmp.eq.s32.totalorder %s26, 0
        // Predicated region
        $region53: #{tpu_custom_call.1} parent=39 // pred_check
          %p339 = pneg %p338
        $region54: #{tpu_custom_call.1} parent=39 // pred_check_branch
          %341 = sbr.rel (%p339) target = $region56
        $region55: #{tpu_custom_call.1} parent=39 // pred_region
          %v342 = vld [vmem:[#allocation2] sm:$0xff]
          %v343 = vld [vmem:[#allocation2 + $0x8] sm:$0xff]
          %344 = vst [vmem:[#allocation8] sm:$0xff] %v342
          %345 = vst [vmem:[#allocation8 + $0x8] sm:$0xff] %v343
        $region56: #{tpu_custom_call.1} parent=39 // pred_fallthru
          _
        %v346 = vld [vmem:[#allocation8] sm:$0xff]
        %v347 = vld [vmem:[#allocation8 + $0x8] sm:$0xff]
        %v348 = vld [vmem:[%s288] sm:$0xff]
        %v349 = vld [vmem:[%s288 + $0x8] sm:$0xff]
        %v350 = vld [vmem:[%s288 + $0x10] sm:$0xff]
        %v351 = vld [vmem:[%s288 + $0x18] sm:$0xff]
        %v352 = vld [vmem:[%s288 + $0x20] sm:$0xff]
        %v353 = vld [vmem:[%s288 + $0x28] sm:$0xff]
        %v354 = vld [vmem:[%s288 + $0x30] sm:$0xff]
        %v355 = vld [vmem:[%s288 + $0x38] sm:$0xff]
        %v356 = vld [vmem:[%s288 + $0x40] sm:$0xff]
        %v357 = vld [vmem:[%s288 + $0x48] sm:$0xff]
        %v358 = vld [vmem:[%s288 + $0x50] sm:$0xff]
        %v359 = vld [vmem:[%s288 + $0x58] sm:$0xff]
        %v360 = vld [vmem:[%s288 + $0x60] sm:$0xff]
        %v361 = vld [vmem:[%s288 + $0x68] sm:$0xff]
        %v362 = vld [vmem:[%s288 + $0x70] sm:$0xff]
        %v363 = vld [vmem:[%s288 + $0x78] sm:$0xff]
        %v364 = vld [vmem:[%s333] sm:$0x1]
        %v366 = vlaneseq
        %v367 = vshrl.u32 %v366, 7
        %v368 = vsub.s32 0, %v367
        %v369 = vrot.slane %v364, %v368
        %371 = vmatprep.subr.mxu0 0.0
        %372 = vmatpush1.msra.mxu0 %v348
        %373 = vmatprep.subr.mxu0 0.0
        %374 = vmatpush1.msra.mxu0 %v349
        %375 = vmatprep.subr.mxu0 0.0
        %376 = vmatpush1.msra.mxu0 %v350
        %377 = vmatprep.subr.mxu0 0.0
        %378 = vmatpush1.msra.mxu0 %v351
        %379 = vmatprep.subr.mxu0 0.0
        %380 = vmatpush1.msra.mxu0 %v352
        %381 = vmatprep.subr.mxu0 0.0
        %382 = vmatpush1.msra.mxu0 %v353
        %383 = vmatprep.subr.mxu0 0.0
        %384 = vmatpush1.msra.mxu0 %v354
        %385 = vmatprep.subr.mxu0 0.0
        %386 = vmatpush1.msra.mxu0 %v355
        %387 = vmatprep.subr.mxu0 0.0
        %388 = vmatpush1.msra.mxu0 %v356
        %389 = vmatprep.subr.mxu0 0.0
        %390 = vmatpush1.msra.mxu0 %v357
        %391 = vmatprep.subr.mxu0 0.0
        %392 = vmatpush1.msra.mxu0 %v358
        %393 = vmatprep.subr.mxu0 0.0
        %394 = vmatpush1.msra.mxu0 %v359
        %395 = vmatprep.subr.mxu0 0.0
        %396 = vmatpush1.msra.mxu0 %v360
        %397 = vmatprep.subr.mxu0 0.0
        %398 = vmatpush1.msra.mxu0 %v361
        %399 = vmatprep.subr.mxu0 0.0
        %400 = vmatpush1.msra.mxu0 %v362
        %401 = vmatprep.subr.mxu0 0.0
        %402 = vmatpush1.msra.mxu0 %v363
        %403 = vmatprep.subr.mxu0 0.0
        %404 = vmatpush1.msra.mxu0 0.0
        %405 = vmatprep.subr.mxu0 0.0
        %406 = vmatpush1.msra.mxu0 0.0
        %407 = vmatprep.subr.mxu0 0.0
        %408 = vmatpush1.msra.mxu0 0.0
        %409 = vmatprep.subr.mxu0 0.0
        %410 = vmatpush1.msra.mxu0 0.0
        %411 = vmatprep.subr.mxu0 0.0
        %412 = vmatpush1.msra.mxu0 0.0
        %413 = vmatprep.subr.mxu0 0.0
        %414 = vmatpush1.msra.mxu0 0.0
        %415 = vmatprep.subr.mxu0 0.0
        %416 = vmatpush1.msra.mxu0 0.0
        %417 = vmatprep.subr.mxu0 0.0
        %418 = vmatpush1.msra.mxu0 0.0
        %419 = vmatprep.subr.mxu0 0.0
        %420 = vmatpush1.msra.mxu0 0.0
        %421 = vmatprep.subr.mxu0 0.0
        %422 = vmatpush1.msra.mxu0 0.0
        %423 = vmatprep.subr.mxu0 0.0
        %424 = vmatpush1.msra.mxu0 0.0
        %425 = vmatprep.subr.mxu0 0.0
        %426 = vmatpush1.msra.mxu0 0.0
        %427 = vmatprep.subr.mxu0 0.0
        %428 = vmatpush1.msra.mxu0 0.0
        %429 = vmatprep.subr.mxu0 0.0
        %430 = vmatpush1.msra.mxu0 0.0
        %431 = vmatprep.subr.mxu0 0.0
        %432 = vmatpush1.msra.mxu0 0.0
        %433 = vmatprep.subr.mxu0 0.0
        %434 = vmatpush1.msra.mxu0 0.0
        %435 = vmatprep.mubr.f32.mxu0 0.0
        %436 = vmatmul.mubr.f32.gmra.mrb[0].mxu0 %v346
        %v437 = vpop.f32.mrb[0].mxu0
        %v438 = vadd.f32 %v369, %v437
        %v439 = vpop.f32.mrb[0].mxu0
        %440 = vmatprep.mubr.f32.mxu0 0.0
        %441 = vmatmul.mubr.f32.gmra.mrb[0].mxu0 %v347
        %v442 = vpop.f32.mrb[0].mxu0
        %v443 = vadd.f32 %v369, %v442
        %v444 = vpop.f32.mrb[0].mxu0
        %445 = vdwg.mxu0
        %v446 = vmax.f32 %v438, 0.0
        %v447 = vmax.f32 %v443, 0.0
        %v448 = vld [vmem:[%s297] sm:$0xff]
        %v449 = vld [vmem:[%s297 + $0x8] sm:$0xff]
        %v450 = vld [vmem:[%s297 + $0x10] sm:$0xff]
        %v451 = vld [vmem:[%s297 + $0x18] sm:$0xff]
        %v452 = vld [vmem:[%s297 + $0x20] sm:$0xff]
        %v453 = vld [vmem:[%s297 + $0x28] sm:$0xff]
        %v454 = vld [vmem:[%s297 + $0x30] sm:$0xff]
        %v455 = vld [vmem:[%s297 + $0x38] sm:$0xff]
        %v456 = vld [vmem:[%s297 + $0x40] sm:$0xff]
        %v457 = vld [vmem:[%s297 + $0x48] sm:$0xff]
        %v458 = vld [vmem:[%s297 + $0x50] sm:$0xff]
        %v459 = vld [vmem:[%s297 + $0x58] sm:$0xff]
        %v460 = vld [vmem:[%s297 + $0x60] sm:$0xff]
        %v461 = vld [vmem:[%s297 + $0x68] sm:$0xff]
        %v462 = vld [vmem:[%s297 + $0x70] sm:$0xff]
        %v463 = vld [vmem:[%s297 + $0x78] sm:$0xff]
        %v464 = vld [vmem:[%s336] sm:$0x1]
        %v466 = vlaneseq
        %v467 = vshrl.u32 %v466, 7
        %v468 = vsub.s32 0, %v467
        %v469 = vrot.slane %v464, %v468
        %471 = vmatprep.subr.mxu0 0.0
        %472 = vmatpush1.msra.mxu0 %v448
        %473 = vmatprep.subr.mxu0 0.0
        %474 = vmatpush1.msra.mxu0 %v449
        %475 = vmatprep.subr.mxu0 0.0
        %476 = vmatpush1.msra.mxu0 %v450
        %477 = vmatprep.subr.mxu0 0.0
        %478 = vmatpush1.msra.mxu0 %v451
        %479 = vmatprep.subr.mxu0 0.0
        %480 = vmatpush1.msra.mxu0 %v452
        %481 = vmatprep.subr.mxu0 0.0
        %482 = vmatpush1.msra.mxu0 %v453
        %483 = vmatprep.subr.mxu0 0.0
        %484 = vmatpush1.msra.mxu0 %v454
        %485 = vmatprep.subr.mxu0 0.0
        %486 = vmatpush1.msra.mxu0 %v455
        %487 = vmatprep.subr.mxu0 0.0
        %488 = vmatpush1.msra.mxu0 %v456
        %489 = vmatprep.subr.mxu0 0.0
        %490 = vmatpush1.msra.mxu0 %v457
        %491 = vmatprep.subr.mxu0 0.0
        %492 = vmatpush1.msra.mxu0 %v458
        %493 = vmatprep.subr.mxu0 0.0
        %494 = vmatpush1.msra.mxu0 %v459
        %495 = vmatprep.subr.mxu0 0.0
        %496 = vmatpush1.msra.mxu0 %v460
        %497 = vmatprep.subr.mxu0 0.0
        %498 = vmatpush1.msra.mxu0 %v461
        %499 = vmatprep.subr.mxu0 0.0
        %500 = vmatpush1.msra.mxu0 %v462
        %501 = vmatprep.subr.mxu0 0.0
        %502 = vmatpush1.msra.mxu0 %v463
        %503 = vmatprep.subr.mxu0 0.0
        %504 = vmatpush1.msra.mxu0 0.0
        %505 = vmatprep.subr.mxu0 0.0
        %506 = vmatpush1.msra.mxu0 0.0
        %507 = vmatprep.subr.mxu0 0.0
        %508 = vmatpush1.msra.mxu0 0.0
        %509 = vmatprep.subr.mxu0 0.0
        %510 = vmatpush1.msra.mxu0 0.0
        %511 = vmatprep.subr.mxu0 0.0
        %512 = vmatpush1.msra.mxu0 0.0
        %513 = vmatprep.subr.mxu0 0.0
        %514 = vmatpush1.msra.mxu0 0.0
        %515 = vmatprep.subr.mxu0 0.0
        %516 = vmatpush1.msra.mxu0 0.0
        %517 = vmatprep.subr.mxu0 0.0
        %518 = vmatpush1.msra.mxu0 0.0
        %519 = vmatprep.subr.mxu0 0.0
        %520 = vmatpush1.msra.mxu0 0.0
        %521 = vmatprep.subr.mxu0 0.0
        %522 = vmatpush1.msra.mxu0 0.0
        %523 = vmatprep.subr.mxu0 0.0
        %524 = vmatpush1.msra.mxu0 0.0
        %525 = vmatprep.subr.mxu0 0.0
        %526 = vmatpush1.msra.mxu0 0.0
        %527 = vmatprep.subr.mxu0 0.0
        %528 = vmatpush1.msra.mxu0 0.0
        %529 = vmatprep.subr.mxu0 0.0
        %530 = vmatpush1.msra.mxu0 0.0
        %531 = vmatprep.subr.mxu0 0.0
        %532 = vmatpush1.msra.mxu0 0.0
        %533 = vmatprep.subr.mxu0 0.0
        %534 = vmatpush1.msra.mxu0 0.0
        %535 = vmatprep.mubr.f32.mxu0 0.0
        %536 = vmatmul.mubr.f32.gmra.mrb[0].mxu0 %v346
        %v537 = vpop.f32.mrb[0].mxu0
        %v538 = vadd.f32 %v469, %v537
        %v539 = vpop.f32.mrb[0].mxu0
        %540 = vmatprep.mubr.f32.mxu0 0.0
        %541 = vmatmul.mubr.f32.gmra.mrb[0].mxu0 %v347
        %v542 = vpop.f32.mrb[0].mxu0
        %v543 = vadd.f32 %v469, %v542
        %v544 = vpop.f32.mrb[0].mxu0
        %545 = vdwg.mxu0
        %v546 = vxor.u32 %v538, 2147483648
        %v547 = vxor.u32 %v543, 2147483648
        %v548 = vmul.f32 %v546, 1.442695
        %v549 = vpow.pop %v548
        %v550 = vmul.f32 %v547, 1.442695
        %v551 = vpow.pop %v550
        %v552 = vadd.f32 %v549, 1.0
        %v553 = vadd.f32 %v551, 1.0
        %v554 = vrcp.pop %v552
        %v555 = vmul.f32 1.0, %v554
        %v556 = vrcp.pop %v553
        %v557 = vmul.f32 1.0, %v556
        %v558 = vsub.f32 %v346, %v446
        %v559 = vsub.f32 %v347, %v447
        %v560 = vmul.f32 %v555, %v558
        %v561 = vmul.f32 %v557, %v559
        %v562 = vadd.f32 %v446, %v560
        %v563 = vadd.f32 %v447, %v561
        %564 = vst [vmem:[#allocation8] sm:$0xff] %v562
        %565 = vst [vmem:[#allocation8 + $0x8] sm:$0xff] %v563
        // Predicated region
        $region57: #{tpu_custom_call.1} parent=39 // pred_check
          %p566 = pneg %p181
        $region58: #{tpu_custom_call.1} parent=39 // pred_check_branch
          %568 = sbr.rel (%p566) target = $region60
        $region59: #{tpu_custom_call.1} parent=39 // pred_region
          %s569 = smul.u32 2, %s25
          %s571 = ssub.s32 256, 256
          %572 = vsyncadd [#allocation4], %s571
          %s573 = smul.addr %s569, 128
          %s574 = scalar_lea.hbm %s5, %s573
          %s575 = sshll.u32 [#allocation8], 4
          %s576 = int_to_ptr.vmem [resolvable:$true] %s575
          %581 = dma.vmem_to_hbm [thread:$0]  %s576, 256, %s574, [#allocation4], 128, 128, 8
        $region60: #{tpu_custom_call.1} parent=39 // pred_fallthru
          _
        // Predicated region
        $region61: #{tpu_custom_call.1} parent=39 // pred_check
          %p582 = pneg %p181
        $region62: #{tpu_custom_call.1} parent=39 // pred_check_branch
          %584 = sbr.rel (%p582) target = $region64
        $region63: #{tpu_custom_call.1} parent=39 // pred_region
          %585 = dma.done [#allocation4], 256
        $region64: #{tpu_custom_call.1} parent=39 // pred_fallthru
          _
      $region40: #{tpu_custom_call.1} parent=5 // pred_fallthru
        _
      %p586 = scmp.le.s32.totalorder 2, %s16
      // Predicated region
      $region65: #{tpu_custom_call.1} parent=5 // pred_check
        %p587 = pneg %p586
      $region66: #{tpu_custom_call.1} parent=5 // pred_check_branch
        %589 = sbr.rel (%p587) target = $region68
      $region67: #{tpu_custom_call.1} parent=5 // pred_region
        %s590 = ssub.s32 %s16, 2
      $region68: #{tpu_custom_call.1} parent=5 // pred_fallthru
        _
    $region6: #{tpu_custom_call.1} parent=1 // loop_footer
      %s20 = sadd.s32 1, %s16
    $region7: #{tpu_custom_call.1} parent=1 // loop_footer_branch
      %15 = sbr.rel target = $region3
    $region8: #{tpu_custom_call.1} parent=1 // loop_exit
      _
    %591 = vsyncpa [#allocation3], 1
    %s592 = scalar_lea.sflag [#allocation3], 1
    %593 = vsyncpa %s592, 1
    %594 = vsyncpa [#allocation6], 1
    %s595 = scalar_lea.sflag [#allocation6], 1
    %596 = vsyncpa %s595, 1
    %597 = vsyncpa [#allocation4], 1
    %s598 = scalar_lea.sflag [#allocation4], 1
    %599 = vsyncpa %s598, 1

</llo_original>
